<compile_context>
chip_gen: v7x
topology: tpu7x:2x2x1
jax: 0.10.0
libtpu: 0.0.40
codegen_flags: <defaults>
</compile_context>

<pallas_src>
import numpy as np
import jax
import jax.numpy as jnp
from jax.experimental import pallas as pl
from jax.experimental.pallas import tpu as pltpu


def _round_up(x, m):
    return ((int(x) + m - 1) // m) * m


def _make_kernel(partitioned, n_tables, d_embedding, eps, has_extra):
    def kernel(*refs):
        if has_extra:
            (idx_ref, timing_ref, extra_ref, table_ref, a_ref, b_ref,
             ann_ref, acc_ref) = refs
        else:
            (idx_ref, timing_ref, table_ref, a_ref, b_ref,
             ann_ref, acc_ref) = refs

        k = pl.program_id(1)
        tile_t = idx_ref.shape[0]
        tile_v = table_ref.shape[0]

        @pl.when(k == 0)
        def _init():
            acc_ref[...] = jnp.zeros_like(acc_ref)

        # Multi-hot selector for THIS vocab block only: [tile_t, tile_v].
        # One iota, reused by every level (JAX does not CSE broadcast_in_dim).
        v_base = k * tile_v
        iota = jax.lax.broadcasted_iota(jnp.int32, (tile_t, tile_v), 1) + v_base
        hot = idx_ref[:, 0:1] == iota
        for lvl in range(1, n_tables):
            hot = jnp.logical_or(hot, idx_ref[:, lvl:lvl + 1] == iota)

        # One MXU matmul per vocab block performs the gathers AND their sum;
        # accumulated across vocab blocks in f32 scratch.
        acc_ref[...] += jnp.dot(hot.astype(table_ref.dtype), table_ref[...],
                                preferred_element_type=jnp.float32)

        @pl.when(k == pl.num_programs(1) - 1)
        def _finalize():
            content = acc_ref[...]
            if has_extra:
                content = content + extra_ref[...]
            timing = timing_ref[...].astype(jnp.float32)
            if partitioned:
                # d_content is padded to a multiple of 128, so this concat is
                # lane-aligned (no cross-lane relayout).
                ann = jnp.concatenate([content, timing], axis=-1)
            else:
                ann = content + timing

            # LayerNormalization over the REAL d_embedding features only.
            # Padded columns of `ann` are exactly zero, so their contribution
            # to the centered sum of squares is n_pad * mu^2; remove it.
            n_pad = ann.shape[-1] - d_embedding
            mu = jnp.sum(ann, axis=-1, keepdims=True) * (1.0 / d_embedding)
            diff = ann - mu
            ssq = jnp.sum(diff * diff, axis=-1, keepdims=True)
            if n_pad:
                ssq = ssq - float(n_pad) * (mu * mu)
            var = ssq / (d_embedding - 1)        # torch.std: unbiased (ddof=1)
            inv = pl.reciprocal(jnp.sqrt(var) + eps, approx=False)
            # a_ref / b_ref are zero in the padded columns -> padded output
            # columns are exactly zero and are sliced off in the wrapper.
            ann_ref[...] = diff * inv * a_ref[...] + b_ref[...]

    return kernel


def multi_level_embedding(xs, seq_lens, emb_tables, position_table, a_2, b_2,
                          d_positional=None, extra_content_annotations=None,
                          eps=1e-3, tile_t=None, tile_v=None,
                          table_dtype=jnp.float32, validate=False):
    """Pallas implementation of MultiLevelEmbedding.forward (eval mode).

    xs:        list of [T] int32 index arrays (one per embedding table)
    seq_lens:  python list of sentence lengths (sum == T)
    Returns (annotations [T, d_embedding], timing_signal [T, d_positional]).
    """
    n_tables = len(emb_tables)
    assert len(xs) == n_tables and n_tables >= 1
    d_content = int(emb_tables[0].shape[1])
    partitioned = d_positional is not None
    d_embedding = d_content + int(d_positional) if partitioned else d_content
    d_pos = int(d_positional) if partitioned else d_content

    seq_lens = [int(l) for l in seq_lens]
    T = int(sum(seq_lens))
    assert T > 0, "empty packed batch"

    vocab_sizes = [int(t.shape[0]) for t in emb_tables]
    V_total = int(sum(vocab_sizes))
    offsets = np.concatenate([[0], np.cumsum(vocab_sizes)[:-1]]).astype(np.int32)

    if validate:
        # Optional: out-of-range indices would silently give all-zero one-hot
        # rows (embedding = 0) instead of erroring like PyTorch.  Single
        # device sync, off by default (it serializes the host).
        if max(seq_lens) > int(position_table.shape[0]):
            raise ValueError("seq_len exceeds position_table max_len")
        checks = [jnp.logical_and(jnp.min(jnp.asarray(xs[l])) >= 0,
                                  jnp.max(jnp.asarray(xs[l])) < vocab_sizes[l])
                  for l in range(n_tables)]
        if not bool(jax.device_get(jnp.all(jnp.stack(checks)))):
            raise ValueError("embedding index out of range")

    # ---- lane-dense padding of the feature dims (multiples of 128) --------
    d_content_p = _round_up(d_content, 128)
    d_pos_p = _round_up(d_pos, 128)
    d_emb_p = d_content_p + d_pos_p if partitioned else d_content_p

    has_extra = extra_content_annotations is not None
    itemsize = jnp.dtype(table_dtype).itemsize

    # ---- generation-aware VMEM budget --------------------------------------
    try:
        vmem_cap = int(pltpu.get_tpu_info().vmem_capacity_bytes)
    except Exception:
        vmem_cap = 64 << 20          # conservative (v7x-sized) fallback
    budget = (vmem_cap * 3) // 4     # leave headroom for compiler scratch

    # ---- token-tile size ----------------------------------------------------
    if tile_t is None:
        tile_t = 512 if budget >= (72 << 20) else 256   # 128MiB parts vs v7x
    # Keep >= 2 token tiles so the "parallel" axis can shard across both
    # TensorCores on v7x (harmless elsewhere).
    tile_t = max(8, min(_round_up(tile_t, 8), _round_up(-(-T // 2), 8)))

    def vmem_bytes(tt, tv, table_bufs):
        b = 2 * tt * 128 * 4                      # idx block (lane-padded DMA)
        b += 2 * tt * d_pos_p * 4                 # timing (double-buffered)
        if has_extra:
            b += 2 * tt * d_content_p * 4         # extra annotations
        b += 2 * tt * d_emb_p * 4                 # output block
        b += tt * d_content_p * 4                 # accumulator scratch
        b += 2 * 8 * d_emb_p * 4                  # a_2 / b_2 rows
        b += 2 * tt * d_emb_p * 4                 # finalize temporaries
        b += table_bufs * tv * d_content_p * itemsize
        b += 3 * tt * tv * 4                      # iota(i32) + selector temps
        return b

    V_min = _round_up(V_total, 16)
    while True:
        avail = budget - vmem_bytes(tile_t, 0, 0) - (2 << 20)
        per_v = 2 * d_content_p * itemsize + 3 * tile_t * 4
        tv_max = ((avail // per_v) // 16) * 16 if avail > 0 else 0
        if tv_max >= 16 or tile_t <= 8:
            break
        tile_t = max(8, ((tile_t // 2) // 8) * 8)
    if tv_max < 16:
        raise ValueError("feature dims too large for a single token tile in VMEM")

    if tile_v is None:
        tile_v = min(V_min, tv_max)
    else:
        tile_v = min(_round_up(tile_v, 16), V_min, tv_max)
    tile_v = max(16, tile_v)

    V_pad = _round_up(V_total, tile_v)
    n_vblocks = V_pad // tile_v
    n_tiles = -(-T // tile_t)
    T_pad = n_tiles * tile_t

    table_bufs = 1 if n_vblocks == 1 else 2
    est = vmem_bytes(tile_t, tile_v, table_bufs) + (4 << 20)
    vmem_limit = int(min((vmem_cap * 9) // 10, max(est, 32 << 20)))

    # ---- build (padded) kernel inputs ---------------------------------------
    # Stack all embedding tables along the vocab axis; offset each level's
    # indices into the stacked table so one multi-hot matmul does all lookups.
    table = jnp.concatenate([jnp.asarray(t, jnp.float32) for t in emb_tables],
                            axis=0)
    table_pad = jnp.zeros((V_pad, d_content_p), table_dtype)
    table_pad = table_pad.at[:V_total, :d_content].set(table.astype(table_dtype))

    idx_cols = [jnp.asarray(xs[l], jnp.int32) + int(offsets[l])
                for l in range(n_tables)]
    idx = jnp.zeros((T_pad, n_tables), jnp.int32).at[:T].set(
        jnp.stack(idx_cols, axis=1))
    # TODO(synk): idx could be passed via scalar-prefetch (SMEM) or stored
    # [n_tables, T_pad] to make the streamed block lane-dense (small win); it
    # is also the precursor to an HBM make_async_copy row-gather path that
    # would replace the multi-hot matmul for very large vocabularies.

    # Timing signal: per-sentence arange -> contiguous row gather in the
    # wrapper (plain XLA gather), streamed into the kernel as data.
    pos_idx = np.concatenate([np.arange(L, dtype=np.int32) for L in seq_lens])
    timing = jnp.take(jnp.asarray(position_table, jnp.float32),
                      jnp.asarray(pos_idx), axis=0)            # [T, d_pos]
    timing_pad = jnp.zeros((T_pad, d_pos_p), jnp.float32).at[:T, :d_pos].set(timing)

    a_vec = jnp.asarray(a_2, jnp.float32).reshape(-1)
    b_vec = jnp.asarray(b_2, jnp.float32).reshape(-1)
    a_row = jnp.zeros((1, d_emb_p), jnp.float32).at[0, :d_content].set(a_vec[:d_content])
    b_row = jnp.zeros((1, d_emb_p), jnp.float32).at[0, :d_content].set(b_vec[:d_content])
    if partitioned:
        a_row = a_row.at[0, d_content_p:d_content_p + d_pos].set(a_vec[d_content:])
        b_row = b_row.at[0, d_content_p:d_content_p + d_pos].set(b_vec[d_content:])

    inputs = [idx, timing_pad]
    if has_extra:
        extra_pad = jnp.zeros((T_pad, d_content_p), jnp.float32)
        extra_pad = extra_pad.at[:T, :d_content].set(
            jnp.asarray(extra_content_annotations, jnp.float32))
        inputs.append(extra_pad)
    inputs += [table_pad, a_row, b_row]

    kernel = _make_kernel(partitioned, n_tables, d_embedding, eps, has_extra)

    def build(single_buffer_residents):
        def resident_spec(shape, index_map):
            # Revisited-every-step inputs only need ONE buffer.
            if single_buffer_residents:
                return pl.BlockSpec(shape, index_map, pipeline_mode=pl.Buffered(1))
            return pl.BlockSpec(shape, index_map)

        def tok_spec(width):
            # Token-tile blocks: streamed + auto double-buffered across i.
            return pl.BlockSpec((tile_t, width), lambda i, k: (i, 0))

        in_specs = [tok_spec(n_tables), tok_spec(d_pos_p)]
        if has_extra:
            in_specs.append(tok_spec(d_content_p))
        if n_vblocks == 1:
            table_spec = resident_spec((tile_v, d_content_p), lambda i, k: (k, 0))
        else:
            table_spec = pl.BlockSpec((tile_v, d_content_p), lambda i, k: (k, 0))
        in_specs += [table_spec,
                     resident_spec((1, d_emb_p), lambda i, k: (0, 0)),
                     resident_spec((1, d_emb_p), lambda i, k: (0, 0))]

        return pl.pallas_call(
            kernel,
            out_shape=jax.ShapeDtypeStruct((T_pad, d_emb_p), jnp.float32),
            grid=(n_tiles, n_vblocks),
            in_specs=in_specs,
            out_specs=pl.BlockSpec((tile_t, d_emb_p), lambda i, k: (i, 0)),
            scratch_shapes=[pltpu.VMEM((tile_t, d_content_p), jnp.float32)],
            compiler_params=pltpu.CompilerParams(
                dimension_semantics=("parallel", "arbitrary"),
                vmem_limit_bytes=vmem_limit),
        )

    try:
        ann_pad = build(True)(*inputs)
    except Exception:
        # Fallback for jax versions that reject pipeline_mode=pl.Buffered(1):
        # identical numerics, default double-buffered resident inputs.
        ann_pad = build(False)(*inputs)

    # Strip padding (padded tail rows / padded zero columns are discarded).
    if partitioned:
        if d_content_p == d_content and d_pos_p == d_pos:
            ann = ann_pad[:T]
        else:
            ann = jnp.concatenate(
                [ann_pad[:T, :d_content],
                 ann_pad[:T, d_content_p:d_content_p + d_pos]], axis=1)
    else:
        ann = ann_pad[:T, :d_embedding]
    return ann, timing


def _reference(xs, seq_lens, emb_tables, position_table, a_2, b_2,
               d_positional, extra=None, eps=1e-3):
    """Pure-JAX reference mirroring the PyTorch forward (eval mode)."""
    content = sum(emb_tables[i][xs[i]] for i in range(len(xs)))
    if extra is not None:
        content = content + extra
    timing = jnp.concatenate([position_table[:L] for L in seq_lens], axis=0)
    if d_positional is not None:
        ann = jnp.concatenate([content, timing], axis=1)
    else:
        ann = content + timing
    mu = jnp.mean(ann, axis=-1, keepdims=True)
    sigma = jnp.std(ann, axis=-1, keepdims=True, ddof=1)  # torch.std (unbiased)
    ln = (ann - mu) / (sigma + eps) * a_2[None, :] + b_2[None, :]
    return ln, timing


if __name__ == "__main__":
    # Module config (small, partitioned): d_embedding=32, d_positional=16
    num_embeddings_list = [32, 16]
    d_embedding = 32
    d_positional = 16
    d_content = d_embedding - d_positional  # 16
    max_len = 64
    seq_lens = [5, 8]            # packed batch of 2 sentences, T = 13
    T = sum(seq_lens)

    key = jax.random.PRNGKey(0)
    ks = jax.random.split(key, 8)
    emb0 = jax.random.normal(ks[0], (num_embeddings_list[0], d_content), jnp.float32)
    emb1 = jax.random.normal(ks[1], (num_embeddings_list[1], d_content), jnp.float32)
    position_table = jax.random.normal(ks[2], (max_len, d_positional), jnp.float32)
    a_2 = 1.0 + 0.1 * jax.random.normal(ks[3], (d_embedding,), jnp.float32)
    b_2 = 0.1 * jax.random.normal(ks[4], (d_embedding,), jnp.float32)
    x0 = jax.random.randint(ks[5], (T,), 0, num_embeddings_list[0], jnp.int32)
    x1 = jax.random.randint(ks[6], (T,), 0, num_embeddings_list[1], jnp.int32)
    extra = 0.1 * jax.random.normal(ks[7], (T, d_content), jnp.float32)

    # Case 1: partitioned, no extra annotations (resident, single vocab block).
    ann, timing = multi_level_embedding(
        [x0, x1], seq_lens, [emb0, emb1], position_table, a_2, b_2,
        d_positional=d_positional)
    jax.block_until_ready((ann, timing))
    ann_ref, timing_ref = _reference([x0, x1], seq_lens, [emb0, emb1],
                                     position_table, a_2, b_2, d_positional)
    np.testing.assert_allclose(np.asarray(timing), np.asarray(timing_ref),
                               rtol=1e-5, atol=1e-5)
    np.testing.assert_allclose(np.asarray(ann), np.asarray(ann_ref),
                               rtol=1e-4, atol=1e-4)

    # Case 2: extra annotations + forced vocab blocking (tile_v=16 -> 3 blocks)
    # to exercise the accumulator grid axis.
    ann2, _ = multi_level_embedding(
        [x0, x1], seq_lens, [emb0, emb1], position_table, a_2, b_2,
        d_positional=d_positional, extra_content_annotations=extra, tile_v=16)
    jax.block_until_ready(ann2)
    ann2_ref, _ = _reference([x0, x1], seq_lens, [emb0, emb1],
                             position_table, a_2, b_2, d_positional, extra=extra)
    np.testing.assert_allclose(np.asarray(ann2), np.asarray(ann2_ref),
                               rtol=1e-4, atol=1e-4)

    # Case 3: opt-in bf16 stacked table (MXU-native); looser tolerance because
    # only the table rounding differs from the f32 reference.
    ann3, _ = multi_level_embedding(
        [x0, x1], seq_lens, [emb0, emb1], position_table, a_2, b_2,
        d_positional=d_positional, extra_content_annotations=extra,
        table_dtype=jnp.bfloat16)
    jax.block_until_ready(ann3)
    np.testing.assert_allclose(np.asarray(ann3), np.asarray(ann2_ref),
                               rtol=5e-2, atol=5e-2)

    # Case 4: non-partitioned path (content + timing share d_embedding=16).
    ann4, timing4 = multi_level_embedding(
        [x0, x1], seq_lens, [emb0, emb1], position_table, a_2[:16], b_2[:16],
        d_positional=None)
    jax.block_until_ready((ann4, timing4))
    ann4_ref, timing4_ref = _reference([x0, x1], seq_lens, [emb0, emb1],
                                       position_table, a_2[:16], b_2[:16], None)
    np.testing.assert_allclose(np.asarray(timing4), np.asarray(timing4_ref),
                               rtol=1e-5, atol=1e-5)
    np.testing.assert_allclose(np.asarray(ann4), np.asarray(ann4_ref),
                               rtol=1e-4, atol=1e-4)

    # TODO(synk): FeatureDropout / timing_dropout / extra_content_dropout
    # (training-mode stochastic per-batch-element feature masking) are
    # identity at inference and are not implemented here.
    print("KERNEL_OK")
</pallas_src>

<mosaic_0001>
module attributes {stable_mosaic.version = 11 : i64} {
  func.func @kernel(%arg0: i32, %arg1: i32, %arg2: memref<8x2xi32, #tpu.memory_space<vmem>>, %arg3: memref<8x128xf32, #tpu.memory_space<vmem>>, %arg4: memref<48x128xf32, #tpu.memory_space<vmem>>, %arg5: memref<1x256xf32, #tpu.memory_space<vmem>>, %arg6: memref<1x256xf32, #tpu.memory_space<vmem>>, %arg7: memref<8x256xf32, #tpu.memory_space<vmem>>, %arg8: memref<8x128xf32, #tpu.memory_space<vmem>>) attributes {dimension_semantics = [#tpu.dimension_semantics<parallel>, #tpu.dimension_semantics<arbitrary>], iteration_bounds = array<i64: 2, 1>, scalar_prefetch = 0 : i64, scratch_operands = 1 : i64, tpu.core_type = #tpu.core_type<tc>, window_params = [{transform_indices = @transform_0, window_bounds = array<i64: 8, 2>}, {transform_indices = @transform_1, window_bounds = array<i64: 8, 128>}, {pipeline_mode = #tpu.pipeline_mode<synchronous>, transform_indices = @transform_2, window_bounds = array<i64: 48, 128>}, {pipeline_mode = #tpu.pipeline_mode<synchronous>, transform_indices = @transform_3, window_bounds = array<i64: 1, 256>}, {pipeline_mode = #tpu.pipeline_mode<synchronous>, transform_indices = @transform_4, window_bounds = array<i64: 1, 256>}, {transform_indices = @transform_5, window_bounds = array<i64: 8, 256>}]} {
    %c0_i32 = arith.constant 0 : i32
    %0 = arith.cmpi eq, %arg1, %c0_i32 : i32
    %1 = arith.extui %0 : i1 to i32
    %c0_i32_0 = arith.constant 0 : i32
    %2 = arith.cmpi ne, %1, %c0_i32_0 : i32
    scf.if %2 {
      %cst_11 = arith.constant 0.000000e+00 : f32
      %24 = vector.broadcast %cst_11 : f32 to vector<8x128xf32>
      %c0_12 = arith.constant 0 : index
      %c0_13 = arith.constant 0 : index
      %25 = vector.load %arg8[%c0_12, %c0_13] : memref<8x128xf32, #tpu.memory_space<vmem>>, vector<8x128xf32>
      tpu.vector_store %arg8[%c0_12, %c0_13], %24 {strides = array<i32>} : memref<8x128xf32, #tpu.memory_space<vmem>>, vector<8x128xf32>,
    } else {
    }
    %c48_i32 = arith.constant 48 : i32
    %3 = arith.muli %arg1, %c48_i32 : i32
    %4 = tpu.iota {dimensions = array<i32: 1>} : vector<8x48xi32>
    %5 = vector.broadcast %3 : i32 to vector<8x48xi32>
    %6 = arith.addi %4, %5 : vector<8x48xi32>
    %c0 = arith.constant 0 : index
    %c0_1 = arith.constant 0 : index
    %7 = vector.load %arg2[%c0, %c0_1] : memref<8x2xi32, #tpu.memory_space<vmem>>, vector<8x1xi32>
    %8 = vector.broadcast %7 : vector<8x1xi32> to vector<8x48xi32>
    %9 = arith.cmpi eq, %8, %6 : vector<8x48xi32>
    %c0_2 = arith.constant 0 : index
    %c1 = arith.constant 1 : index
    %10 = vector.load %arg2[%c0_2, %c1] : memref<8x2xi32, #tpu.memory_space<vmem>>, vector<8x1xi32>
    %11 = vector.broadcast %10 : vector<8x1xi32> to vector<8x48xi32>
    %12 = arith.cmpi eq, %11, %6 : vector<8x48xi32>
    %13 = arith.ori %9, %12 : vector<8x48xi1>
    %c0_3 = arith.constant 0 : index
    %c0_4 = arith.constant 0 : index
    %14 = vector.load %arg8[%c0_3, %c0_4] : memref<8x128xf32, #tpu.memory_space<vmem>>, vector<8x128xf32>
    %15 = arith.extui %13 : vector<8x48xi1> to vector<8x48xi32>
    %16 = arith.sitofp %15 : vector<8x48xi32> to vector<8x48xf32>
    %c0_5 = arith.constant 0 : index
    %c0_6 = arith.constant 0 : index
    %17 = vector.load %arg4[%c0_5, %c0_6] : memref<48x128xf32, #tpu.memory_space<vmem>>, vector<48x128xf32>
    %cst = arith.constant dense<0.000000e+00> : vector<8x128xf32>
    %18 = tpu.matmul %16, %17, %cst {dimension_numbers = #tpu.dot_dimension_numbers<[1], [0], [0], [1], [0, 0, 1, 1], [], []>} : vector<8x48xf32>, vector<48x128xf32>, vector<8x128xf32> -> vector<8x128xf32>
    %19 = arith.addf %14, %18 : vector<8x128xf32>
    %c0_7 = arith.constant 0 : index
    %c0_8 = arith.constant 0 : index
    %20 = vector.load %arg8[%c0_7, %c0_8] : memref<8x128xf32, #tpu.memory_space<vmem>>, vector<8x128xf32>
    tpu.vector_store %arg8[%c0_7, %c0_8], %19 {strides = array<i32>} : memref<8x128xf32, #tpu.memory_space<vmem>>, vector<8x128xf32>,
    %c0_i32_9 = arith.constant 0 : i32
    %21 = arith.cmpi eq, %arg1, %c0_i32_9 : i32
    %22 = arith.extui %21 : i1 to i32
    %c0_i32_10 = arith.constant 0 : i32
    %23 = arith.cmpi ne, %22, %c0_i32_10 : i32
    scf.if %23 {
      %c0_11 = arith.constant 0 : index
      %c0_12 = arith.constant 0 : index
      %24 = vector.load %arg8[%c0_11, %c0_12] : memref<8x128xf32, #tpu.memory_space<vmem>>, vector<8x128xf32>
      %c0_13 = arith.constant 0 : index
      %c0_14 = arith.constant 0 : index
      %25 = vector.load %arg3[%c0_13, %c0_14] : memref<8x128xf32, #tpu.memory_space<vmem>>, vector<8x128xf32>
      %26 = tpu.concatenate %24, %25 in 1 : vector<8x128xf32>, vector<8x128xf32> -> vector<8x256xf32>
      %cst_15 = arith.constant dense<0.000000e+00> : vector<8xf32>
      %27 = vector.multi_reduction <add>, %26, %cst_15 [1] : vector<8x256xf32> to vector<8xf32>
      %28 = vector.shape_cast %27 : vector<8xf32> to vector<8x1xf32>
      %cst_16 = arith.constant 3.125000e-02 : f32
      %29 = vector.broadcast %cst_16 : f32 to vector<8x1xf32>
      %30 = arith.mulf %28, %29 : vector<8x1xf32>
      %31 = vector.broadcast %30 : vector<8x1xf32> to vector<8x256xf32>
      %32 = arith.subf %26, %31 : vector<8x256xf32>
      %33 = arith.mulf %32, %32 : vector<8x256xf32>
      %cst_17 = arith.constant dense<0.000000e+00> : vector<8xf32>
      %34 = vector.multi_reduction <add>, %33, %cst_17 [1] : vector<8x256xf32> to vector<8xf32>
      %35 = vector.shape_cast %34 : vector<8xf32> to vector<8x1xf32>
      %36 = arith.mulf %30, %30 : vector<8x1xf32>
      %cst_18 = arith.constant 2.240000e+02 : f32
      %37 = vector.broadcast %cst_18 : f32 to vector<8x1xf32>
      %38 = arith.mulf %37, %36 : vector<8x1xf32>
      %39 = arith.subf %35, %38 : vector<8x1xf32>
      %cst_19 = arith.constant 3.100000e+01 : f32
      %40 = vector.broadcast %cst_19 : f32 to vector<8x1xf32>
      %41 = arith.divf %39, %40 : vector<8x1xf32>
      %42 = math.sqrt %41 : vector<8x1xf32>
      %cst_20 = arith.constant 1.000000e-03 : f32
      %43 = vector.broadcast %cst_20 : f32 to vector<8x1xf32>
      %44 = arith.addf %42, %43 : vector<8x1xf32>
      %45 = tpu.reciprocal %44 : vector<8x1xf32> -> vector<8x1xf32>
      %46 = vector.broadcast %45 : vector<8x1xf32> to vector<8x256xf32>
      %47 = arith.mulf %32, %46 : vector<8x256xf32>
      %c0_21 = arith.constant 0 : index
      %c0_22 = arith.constant 0 : index
      %48 = vector.load %arg5[%c0_21, %c0_22] : memref<1x256xf32, #tpu.memory_space<vmem>>, vector<1x256xf32>
      %49 = vector.broadcast %48 : vector<1x256xf32> to vector<8x256xf32>
      %50 = arith.mulf %47, %49 : vector<8x256xf32>
      %c0_23 = arith.constant 0 : index
      %c0_24 = arith.constant 0 : index
      %51 = vector.load %arg6[%c0_23, %c0_24] : memref<1x256xf32, #tpu.memory_space<vmem>>, vector<1x256xf32>
      %52 = vector.broadcast %51 : vector<1x256xf32> to vector<8x256xf32>
      %53 = arith.addf %50, %52 : vector<8x256xf32>
      %c0_25 = arith.constant 0 : index
      %c0_26 = arith.constant 0 : index
      %54 = vector.load %arg7[%c0_25, %c0_26] : memref<8x256xf32, #tpu.memory_space<vmem>>, vector<8x256xf32>
      tpu.vector_store %arg7[%c0_25, %c0_26], %53 {strides = array<i32>} : memref<8x256xf32, #tpu.memory_space<vmem>>, vector<8x256xf32>,
    } else {
    }
    return
  }
  func.func @transform_0(%arg0: i32, %arg1: i32) -> (i32, i32) {
    %c0_i32 = arith.constant 0 : i32
    %c0_i32_0 = arith.constant 0 : i32
    return %arg0, %c0_i32 : i32, i32
  }
  func.func @transform_1(%arg0: i32, %arg1: i32) -> (i32, i32) {
    %c0_i32 = arith.constant 0 : i32
    %c0_i32_0 = arith.constant 0 : i32
    return %arg0, %c0_i32 : i32, i32
  }
  func.func @transform_2(%arg0: i32, %arg1: i32) -> (i32, i32) {
    %c0_i32 = arith.constant 0 : i32
    %c0_i32_0 = arith.constant 0 : i32
    return %arg1, %c0_i32 : i32, i32
  }
  func.func @transform_3(%arg0: i32, %arg1: i32) -> (i32, i32) {
    %c0_i32 = arith.constant 0 : i32
    %c0_i32_0 = arith.constant 0 : i32
    %c0_i32_1 = arith.constant 0 : i32
    return %c0_i32, %c0_i32_0 : i32, i32
  }
  func.func @transform_4(%arg0: i32, %arg1: i32) -> (i32, i32) {
    %c0_i32 = arith.constant 0 : i32
    %c0_i32_0 = arith.constant 0 : i32
    %c0_i32_1 = arith.constant 0 : i32
    return %c0_i32, %c0_i32_0 : i32, i32
  }
  func.func @transform_5(%arg0: i32, %arg1: i32) -> (i32, i32) {
    %c0_i32 = arith.constant 0 : i32
    %c0_i32_0 = arith.constant 0 : i32
    return %arg0, %c0_i32 : i32, i32
  }
}

module attributes {stable_mosaic.version = 11 : i64} {
  func.func @kernel(%arg0: i32, %arg1: i32, %arg2: memref<8x2xi32, #tpu.memory_space<vmem>>, %arg3: memref<8x128xf32, #tpu.memory_space<vmem>>, %arg4: memref<48x128xf32, #tpu.memory_space<vmem>>, %arg5: memref<1x256xf32, #tpu.memory_space<vmem>>, %arg6: memref<1x256xf32, #tpu.memory_space<vmem>>, %arg7: memref<8x256xf32, #tpu.memory_space<vmem>>, %arg8: memref<8x128xf32, #tpu.memory_space<vmem>>) attributes {dimension_semantics = [#tpu.dimension_semantics<parallel>, #tpu.dimension_semantics<arbitrary>], iteration_bounds = array<i64: 2, 1>, scalar_prefetch = 0 : i64, scratch_operands = 1 : i64, tpu.core_type = #tpu.core_type<tc>, window_params = [{transform_indices = @transform_0, window_bounds = array<i64: 8, 2>}, {transform_indices = @transform_1, window_bounds = array<i64: 8, 128>}, {transform_indices = @transform_2, window_bounds = array<i64: 48, 128>}, {pipeline_mode = #tpu.pipeline_mode<synchronous>, transform_indices = @transform_3, window_bounds = array<i64: 1, 256>}, {pipeline_mode = #tpu.pipeline_mode<synchronous>, transform_indices = @transform_4, window_bounds = array<i64: 1, 256>}, {transform_indices = @transform_5, window_bounds = array<i64: 8, 256>}]} {
    %c0_i32 = arith.constant 0 : i32
    %0 = arith.cmpi eq, %arg1, %c0_i32 : i32
    %1 = arith.extui %0 : i1 to i32
    %c0_i32_0 = arith.constant 0 : i32
    %2 = arith.cmpi ne, %1, %c0_i32_0 : i32
    scf.if %2 {
      %cst_11 = arith.constant 0.000000e+00 : f32
      %24 = vector.broadcast %cst_11 : f32 to vector<8x128xf32>
      %c0_12 = arith.constant 0 : index
      %c0_13 = arith.constant 0 : index
      %25 = vector.load %arg8[%c0_12, %c0_13] : memref<8x128xf32, #tpu.memory_space<vmem>>, vector<8x128xf32>
      tpu.vector_store %arg8[%c0_12, %c0_13], %24 {strides = array<i32>} : memref<8x128xf32, #tpu.memory_space<vmem>>, vector<8x128xf32>,
    } else {
    }
    %c48_i32 = arith.constant 48 : i32
    %3 = arith.muli %arg1, %c48_i32 : i32
    %4 = tpu.iota {dimensions = array<i32: 1>} : vector<8x48xi32>
    %5 = vector.broadcast %3 : i32 to vector<8x48xi32>
    %6 = arith.addi %4, %5 : vector<8x48xi32>
    %c0 = arith.constant 0 : index
    %c0_1 = arith.constant 0 : index
    %7 = vector.load %arg2[%c0, %c0_1] : memref<8x2xi32, #tpu.memory_space<vmem>>, vector<8x1xi32>
    %8 = vector.broadcast %7 : vector<8x1xi32> to vector<8x48xi32>
    %9 = arith.cmpi eq, %8, %6 : vector<8x48xi32>
    %c0_2 = arith.constant 0 : index
    %c1 = arith.constant 1 : index
    %10 = vector.load %arg2[%c0_2, %c1] : memref<8x2xi32, #tpu.memory_space<vmem>>, vector<8x1xi32>
    %11 = vector.broadcast %10 : vector<8x1xi32> to vector<8x48xi32>
    %12 = arith.cmpi eq, %11, %6 : vector<8x48xi32>
    %13 = arith.ori %9, %12 : vector<8x48xi1>
    %c0_3 = arith.constant 0 : index
    %c0_4 = arith.constant 0 : index
    %14 = vector.load %arg8[%c0_3, %c0_4] : memref<8x128xf32, #tpu.memory_space<vmem>>, vector<8x128xf32>
    %15 = arith.extui %13 : vector<8x48xi1> to vector<8x48xi32>
    %16 = arith.sitofp %15 : vector<8x48xi32> to vector<8x48xf32>
    %c0_5 = arith.constant 0 : index
    %c0_6 = arith.constant 0 : index
    %17 = vector.load %arg4[%c0_5, %c0_6] : memref<48x128xf32, #tpu.memory_space<vmem>>, vector<48x128xf32>
    %cst = arith.constant dense<0.000000e+00> : vector<8x128xf32>
    %18 = tpu.matmul %16, %17, %cst {dimension_numbers = #tpu.dot_dimension_numbers<[1], [0], [0], [1], [0, 0, 1, 1], [], []>} : vector<8x48xf32>, vector<48x128xf32>, vector<8x128xf32> -> vector<8x128xf32>
    %19 = arith.addf %14, %18 : vector<8x128xf32>
    %c0_7 = arith.constant 0 : index
    %c0_8 = arith.constant 0 : index
    %20 = vector.load %arg8[%c0_7, %c0_8] : memref<8x128xf32, #tpu.memory_space<vmem>>, vector<8x128xf32>
    tpu.vector_store %arg8[%c0_7, %c0_8], %19 {strides = array<i32>} : memref<8x128xf32, #tpu.memory_space<vmem>>, vector<8x128xf32>,
    %c0_i32_9 = arith.constant 0 : i32
    %21 = arith.cmpi eq, %arg1, %c0_i32_9 : i32
    %22 = arith.extui %21 : i1 to i32
    %c0_i32_10 = arith.constant 0 : i32
    %23 = arith.cmpi ne, %22, %c0_i32_10 : i32
    scf.if %23 {
      %c0_11 = arith.constant 0 : index
      %c0_12 = arith.constant 0 : index
      %24 = vector.load %arg8[%c0_11, %c0_12] : memref<8x128xf32, #tpu.memory_space<vmem>>, vector<8x128xf32>
      %c0_13 = arith.constant 0 : index
      %c0_14 = arith.constant 0 : index
      %25 = vector.load %arg3[%c0_13, %c0_14] : memref<8x128xf32, #tpu.memory_space<vmem>>, vector<8x128xf32>
      %26 = tpu.concatenate %24, %25 in 1 : vector<8x128xf32>, vector<8x128xf32> -> vector<8x256xf32>
      %cst_15 = arith.constant dense<0.000000e+00> : vector<8xf32>
      %27 = vector.multi_reduction <add>, %26, %cst_15 [1] : vector<8x256xf32> to vector<8xf32>
      %28 = vector.shape_cast %27 : vector<8xf32> to vector<8x1xf32>
      %cst_16 = arith.constant 3.125000e-02 : f32
      %29 = vector.broadcast %cst_16 : f32 to vector<8x1xf32>
      %30 = arith.mulf %28, %29 : vector<8x1xf32>
      %31 = vector.broadcast %30 : vector<8x1xf32> to vector<8x256xf32>
      %32 = arith.subf %26, %31 : vector<8x256xf32>
      %33 = arith.mulf %32, %32 : vector<8x256xf32>
      %cst_17 = arith.constant dense<0.000000e+00> : vector<8xf32>
      %34 = vector.multi_reduction <add>, %33, %cst_17 [1] : vector<8x256xf32> to vector<8xf32>
      %35 = vector.shape_cast %34 : vector<8xf32> to vector<8x1xf32>
      %36 = arith.mulf %30, %30 : vector<8x1xf32>
      %cst_18 = arith.constant 2.240000e+02 : f32
      %37 = vector.broadcast %cst_18 : f32 to vector<8x1xf32>
      %38 = arith.mulf %37, %36 : vector<8x1xf32>
      %39 = arith.subf %35, %38 : vector<8x1xf32>
      %cst_19 = arith.constant 3.100000e+01 : f32
      %40 = vector.broadcast %cst_19 : f32 to vector<8x1xf32>
      %41 = arith.divf %39, %40 : vector<8x1xf32>
      %42 = math.sqrt %41 : vector<8x1xf32>
      %cst_20 = arith.constant 1.000000e-03 : f32
      %43 = vector.broadcast %cst_20 : f32 to vector<8x1xf32>
      %44 = arith.addf %42, %43 : vector<8x1xf32>
      %45 = tpu.reciprocal %44 : vector<8x1xf32> -> vector<8x1xf32>
      %46 = vector.broadcast %45 : vector<8x1xf32> to vector<8x256xf32>
      %47 = arith.mulf %32, %46 : vector<8x256xf32>
      %c0_21 = arith.constant 0 : index
      %c0_22 = arith.constant 0 : index
      %48 = vector.load %arg5[%c0_21, %c0_22] : memref<1x256xf32, #tpu.memory_space<vmem>>, vector<1x256xf32>
      %49 = vector.broadcast %48 : vector<1x256xf32> to vector<8x256xf32>
      %50 = arith.mulf %47, %49 : vector<8x256xf32>
      %c0_23 = arith.constant 0 : index
      %c0_24 = arith.constant 0 : index
      %51 = vector.load %arg6[%c0_23, %c0_24] : memref<1x256xf32, #tpu.memory_space<vmem>>, vector<1x256xf32>
      %52 = vector.broadcast %51 : vector<1x256xf32> to vector<8x256xf32>
      %53 = arith.addf %50, %52 : vector<8x256xf32>
      %c0_25 = arith.constant 0 : index
      %c0_26 = arith.constant 0 : index
      %54 = vector.load %arg7[%c0_25, %c0_26] : memref<8x256xf32, #tpu.memory_space<vmem>>, vector<8x256xf32>
      tpu.vector_store %arg7[%c0_25, %c0_26], %53 {strides = array<i32>} : memref<8x256xf32, #tpu.memory_space<vmem>>, vector<8x256xf32>,
    } else {
    }
    return
  }
  func.func @transform_0(%arg0: i32, %arg1: i32) -> (i32, i32) {
    %c0_i32 = arith.constant 0 : i32
    %c0_i32_0 = arith.constant 0 : i32
    return %arg0, %c0_i32 : i32, i32
  }
  func.func @transform_1(%arg0: i32, %arg1: i32) -> (i32, i32) {
    %c0_i32 = arith.constant 0 : i32
    %c0_i32_0 = arith.constant 0 : i32
    return %arg0, %c0_i32 : i32, i32
  }
  func.func @transform_2(%arg0: i32, %arg1: i32) -> (i32, i32) {
    %c0_i32 = arith.constant 0 : i32
    %c0_i32_0 = arith.constant 0 : i32
    return %arg1, %c0_i32 : i32, i32
  }
  func.func @transform_3(%arg0: i32, %arg1: i32) -> (i32, i32) {
    %c0_i32 = arith.constant 0 : i32
    %c0_i32_0 = arith.constant 0 : i32
    %c0_i32_1 = arith.constant 0 : i32
    return %c0_i32, %c0_i32_0 : i32, i32
  }
  func.func @transform_4(%arg0: i32, %arg1: i32) -> (i32, i32) {
    %c0_i32 = arith.constant 0 : i32
    %c0_i32_0 = arith.constant 0 : i32
    %c0_i32_1 = arith.constant 0 : i32
    return %c0_i32, %c0_i32_0 : i32, i32
  }
  func.func @transform_5(%arg0: i32, %arg1: i32) -> (i32, i32) {
    %c0_i32 = arith.constant 0 : i32
    %c0_i32_0 = arith.constant 0 : i32
    return %arg0, %c0_i32 : i32, i32
  }
}

</mosaic_0001>

<llo_original>
// kernel: tpu_custom_call.1
$region0: #{tpu_custom_call.1}
  #allocation0 [shape = 'u32[]', space=smem, size = 0x4, offset = 0x4, fixed_abs, tag = 'smem constant byte address 0x4 - core index']
  #allocation1 [shape = 'u32[144,128]{1,0:T(1,128)}', space=vmem, size = 0x12000, scoped, tag = 'internal scratch']
  #allocation2 [shape = 'f32[8,128]{1,0:T(8,128)}', space=vmem, size = 0x1000, scoped, tag = 'scratch operand']
  %s0 = inlined_call_operand.vmem [shape: s32[16,2], index: 0, kind: input, shape index: {}]
  %s1 = inlined_call_operand.vmem [shape: f32[16,128], index: 1, kind: input, shape index: {}]
  %s2 = inlined_call_operand.hbm [shape: f32[48,128], index: 2, kind: input, shape index: {}]
  %s3 = inlined_call_operand.vmem [shape: f32[1,256], index: 3, kind: input, shape index: {}]
  %s4 = inlined_call_operand.vmem [shape: f32[1,256], index: 4, kind: input, shape index: {}]
  %s5 = inlined_call_operand.hbm [shape: f32[16,256], index: 5, kind: output, shape index: {}]
  %s6 = sld [smem:[#allocation0]]
  $region65: #{tpu_custom_call.1} parent=0
    _
  %s8 = ssub.s32 1, %s6
  %s9 = scalar_select 0, %s8, %s6
  $region1: #{tpu_custom_call.1} parent=0
    #allocation3 [shape = 'u8[24576]{0}', space=vmem, size = 0x6000, scoped, tag = 'input window, operand 2, single buffered']
    #allocation4 [shape = 's32[2]{0}', space=sflag, size = 0x8, scoped, tag = 'scoped memory for tpu_custom_call.1']
    #allocation5 [shape = 's32[2]{0}', space=sflag, size = 0x8, scoped, tag = 'scoped memory for tpu_custom_call.1']
    #allocation6 [shape = 'u8[16384]{0}', space=vmem, size = 0x4000, scoped, tag = 'output window, operand 0']
    %10 = vsyncpa [#allocation4], 0
    %11 = vsyncpa [#allocation5], 0
    %s12 = scalar_lea.sflag [#allocation5], 1
    %13 = vsyncpa %s12, 0
    loop: start=0, step=1, limit=4
    $region2: #{tpu_custom_call.1} parent=1 // loop_pre_header
      _
    $region3: #{tpu_custom_call.1} parent=1 // loop_header
      %s15 = sphi 0, %s19
      %p16 = scmp.ge.s32.totalorder %s15, 4
      %s22 = sphi 0, %s34
      %s23 = sphi 0, %s30
      %s24 = sphi 0, %s22
      %s25 = sphi 0, %s23
      %s26 = sphi 0, %s24
      %s27 = sphi 0, %s25
      %s37 = sphi 0, %s39
      %s40 = sphi 0, %s37
      %s41 = sphi 0, %s40
      %s57 = sphi 0, %s41
      %s63 = sphi 0, %s65
      %s66 = sphi 0, %s63
      %s67 = sphi 0, %s66
      %s83 = sphi 0, %s67
      %s89 = sphi 0, %s91
      %s92 = sphi 0, %s89
      %s93 = sphi 0, %s92
      %s109 = sphi 0, %s93
      %s113 = sphi 0, %s113
      %s115 = sphi 0, %s113
      %s116 = sphi 0, %s115
      %s130 = sphi 0, %s116
      %s134 = sphi 0, %s134
      %s136 = sphi 0, %s134
      %s137 = sphi 0, %s136
      %s151 = sphi 0, %s137
      %s157 = sphi 0, %s159
      %s160 = sphi 0, %s157
      %s161 = sphi 0, %s160
      %s177 = sphi 0, %s161
    $region4: #{tpu_custom_call.1} parent=1 // loop_header_branch
      %18 = sbr.rel (%p16) target = $region8
    $region5: #{tpu_custom_call.1} parent=1 // loop_body
      %s20 = ssub.s32 %s15, 1
      %s21 = ssub.s32 %s15, 2
      %s28 = sadd.s32 1, %s23
      %p29 = scmp.ge.s32.totalorder %s28, 1
      %s30 = scalar_select %p29, 0, %s28
      %s31 = sadd.s32 1, %s22
      %s32 = scalar_select %p29, %s31, %s22
      %p33 = scmp.ge.s32.totalorder %s32, 2
      %s34 = scalar_select %p33, 0, %s32
      %s35 = ssub.s32 %s22, %s34
      %p36 = scmp.eq.s32.totalorder %s35, 0
      %s38 = sadd.s32 %s37, 1
      %s39 = scalar_select %p36, %s37, %s38
      %p42 = pneg %p36
      %p43 = scmp.eq.s32.totalorder %s15, 1
      %p44 = por %p42, %p43
      %p45 = scmp.ne.s32.totalorder %s37, %s40
      %p46 = scmp.eq.s32.totalorder %s15, 0
      %p47 = por %p45, %p46
      %p48 = scmp.ne.s32.totalorder %s37, %s40
      %p49 = scmp.eq.s32.totalorder %s20, 1
      %p50 = por %p48, %p49
      %p51 = scmp.ne.s32.totalorder %s40, %s41
      %p52 = scmp.eq.s32.totalorder %s20, 0
      %p53 = por %p51, %p52
      %p54 = scmp.ne.s32.totalorder %s40, %s41
      %p55 = scmp.eq.s32.totalorder %s21, 1
      %p56 = por %p54, %p55
      %p58 = scmp.ne.s32.totalorder %s41, %s57
      %p59 = scmp.eq.s32.totalorder %s21, 0
      %p60 = por %p58, %p59
      %s61 = ssub.s32 %s22, %s34
      %p62 = scmp.eq.s32.totalorder %s61, 0
      %s64 = sadd.s32 %s63, 1
      %s65 = scalar_select %p62, %s63, %s64
      %p68 = pneg %p62
      %p69 = scmp.eq.s32.totalorder %s15, 1
      %p70 = por %p68, %p69
      %p71 = scmp.ne.s32.totalorder %s63, %s66
      %p72 = scmp.eq.s32.totalorder %s15, 0
      %p73 = por %p71, %p72
      %p74 = scmp.ne.s32.totalorder %s63, %s66
      %p75 = scmp.eq.s32.totalorder %s20, 1
      %p76 = por %p74, %p75
      %p77 = scmp.ne.s32.totalorder %s66, %s67
      %p78 = scmp.eq.s32.totalorder %s20, 0
      %p79 = por %p77, %p78
      %p80 = scmp.ne.s32.totalorder %s66, %s67
      %p81 = scmp.eq.s32.totalorder %s21, 1
      %p82 = por %p80, %p81
      %p84 = scmp.ne.s32.totalorder %s67, %s83
      %p85 = scmp.eq.s32.totalorder %s21, 0
      %p86 = por %p84, %p85
      %s87 = ssub.s32 %s23, %s30
      %p88 = scmp.eq.s32.totalorder %s87, 0
      %s90 = sadd.s32 %s89, 1
      %s91 = scalar_select %p88, %s89, %s90
      %p94 = pneg %p88
      %p95 = scmp.eq.s32.totalorder %s15, 1
      %p96 = por %p94, %p95
      %p97 = scmp.ne.s32.totalorder %s89, %s92
      %p98 = scmp.eq.s32.totalorder %s15, 0
      %p99 = por %p97, %p98
      %p100 = scmp.ne.s32.totalorder %s89, %s92
      %p101 = scmp.eq.s32.totalorder %s20, 1
      %p102 = por %p100, %p101
      %p103 = scmp.ne.s32.totalorder %s92, %s93
      %p104 = scmp.eq.s32.totalorder %s20, 0
      %p105 = por %p103, %p104
      %p106 = scmp.ne.s32.totalorder %s92, %s93
      %p107 = scmp.eq.s32.totalorder %s21, 1
      %p108 = por %p106, %p107
      %p110 = scmp.ne.s32.totalorder %s93, %s109
      %p111 = scmp.eq.s32.totalorder %s21, 0
      %p112 = por %p110, %p111
      %s114 = sadd.s32 %s113, 1
      %p117 = scmp.eq.s32.totalorder %s15, 1
      %p118 = scmp.ne.s32.totalorder %s113, %s115
      %p119 = scmp.eq.s32.totalorder %s15, 0
      %p120 = por %p118, %p119
      %p121 = scmp.ne.s32.totalorder %s113, %s115
      %p122 = scmp.eq.s32.totalorder %s20, 1
      %p123 = por %p121, %p122
      %p124 = scmp.ne.s32.totalorder %s115, %s116
      %p125 = scmp.eq.s32.totalorder %s20, 0
      %p126 = por %p124, %p125
      %p127 = scmp.ne.s32.totalorder %s115, %s116
      %p128 = scmp.eq.s32.totalorder %s21, 1
      %p129 = por %p127, %p128
      %p131 = scmp.ne.s32.totalorder %s116, %s130
      %p132 = scmp.eq.s32.totalorder %s21, 0
      %p133 = por %p131, %p132
      %s135 = sadd.s32 %s134, 1
      %p138 = scmp.eq.s32.totalorder %s15, 1
      %p139 = scmp.ne.s32.totalorder %s134, %s136
      %p140 = scmp.eq.s32.totalorder %s15, 0
      %p141 = por %p139, %p140
      %p142 = scmp.ne.s32.totalorder %s134, %s136
      %p143 = scmp.eq.s32.totalorder %s20, 1
      %p144 = por %p142, %p143
      %p145 = scmp.ne.s32.totalorder %s136, %s137
      %p146 = scmp.eq.s32.totalorder %s20, 0
      %p147 = por %p145, %p146
      %p148 = scmp.ne.s32.totalorder %s136, %s137
      %p149 = scmp.eq.s32.totalorder %s21, 1
      %p150 = por %p148, %p149
      %p152 = scmp.ne.s32.totalorder %s137, %s151
      %p153 = scmp.eq.s32.totalorder %s21, 0
      %p154 = por %p152, %p153
      %s155 = ssub.s32 %s22, %s34
      %p156 = scmp.eq.s32.totalorder %s155, 0
      %s158 = sadd.s32 %s157, 1
      %s159 = scalar_select %p156, %s157, %s158
      %p162 = pneg %p156
      %p163 = scmp.eq.s32.totalorder %s15, 1
      %p164 = por %p162, %p163
      %p165 = scmp.ne.s32.totalorder %s157, %s160
      %p166 = scmp.eq.s32.totalorder %s15, 0
      %p167 = por %p165, %p166
      %p168 = scmp.ne.s32.totalorder %s157, %s160
      %p169 = scmp.eq.s32.totalorder %s20, 1
      %p170 = por %p168, %p169
      %p171 = scmp.ne.s32.totalorder %s160, %s161
      %p172 = scmp.eq.s32.totalorder %s20, 0
      %p173 = por %p171, %p172
      %p174 = scmp.ne.s32.totalorder %s160, %s161
      %p175 = scmp.eq.s32.totalorder %s21, 1
      %p176 = por %p174, %p175
      %p178 = scmp.ne.s32.totalorder %s161, %s177
      %p179 = scmp.eq.s32.totalorder %s21, 0
      %p180 = por %p178, %p179
      %p181 = scmp.le.s32.totalorder 1, %s15
      %p182 = scmp.lt.s32.totalorder %s15, 3
      %p183 = pnand %p181, %p182
      %p184 = pneg %p183
      // Predicated region
      $region9: #{tpu_custom_call.1} parent=5 // pred_check
        _
      $region10: #{tpu_custom_call.1} parent=5 // pred_check_branch
        %186 = sbr.rel (%p183) target = $region12
      $region11: #{tpu_custom_call.1} parent=5 // pred_region
        %s187 = ssub.s32 %s15, 1
        // Predicated region
        $region13: #{tpu_custom_call.1} parent=11 // pred_check
          %p188 = pneg %p105
        $region14: #{tpu_custom_call.1} parent=11 // pred_check_branch
          %190 = sbr.rel (%p188) target = $region16
        $region15: #{tpu_custom_call.1} parent=11 // pred_region
          %s191 = smul.u32 6, %s25
          %s193 = ssub.s32 768, 768
          %194 = vsyncadd [#allocation4], %s193
          %s195 = smul.addr %s191, 128
          %s196 = scalar_lea.hbm %s2, %s195
          %s197 = sshll.u32 [#allocation3], 4
          %s198 = int_to_ptr.vmem [resolvable:$true] %s197
          %203 = dma.hbm_to_vmem [thread:$0]  %s196, 768, %s198, [#allocation4], 128, 128, 8
        $region16: #{tpu_custom_call.1} parent=11 // pred_fallthru
          _
        // Predicated region
        $region17: #{tpu_custom_call.1} parent=11 // pred_check
          %p204 = pneg %p126
        $region18: #{tpu_custom_call.1} parent=11 // pred_check_branch
          %206 = sbr.rel (%p204) target = $region20
        $region19: #{tpu_custom_call.1} parent=11 // pred_region
          _
        $region20: #{tpu_custom_call.1} parent=11 // pred_fallthru
          _
        // Predicated region
        $region21: #{tpu_custom_call.1} parent=11 // pred_check
          %p207 = pneg %p147
        $region22: #{tpu_custom_call.1} parent=11 // pred_check_branch
          %209 = sbr.rel (%p207) target = $region24
        $region23: #{tpu_custom_call.1} parent=11 // pred_region
          _
        $region24: #{tpu_custom_call.1} parent=11 // pred_fallthru
          _
      $region12: #{tpu_custom_call.1} parent=5 // pred_fallthru
        _
      %p210 = scmp.lt.s32.totalorder %s15, 2
      // Predicated region
      $region25: #{tpu_custom_call.1} parent=5 // pred_check
        %p211 = pneg %p210
      $region26: #{tpu_custom_call.1} parent=5 // pred_check_branch
        %213 = sbr.rel (%p211) target = $region28
      $region27: #{tpu_custom_call.1} parent=5 // pred_region
        // Predicated region
        $region29: #{tpu_custom_call.1} parent=27 // pred_check
          %p214 = pneg %p47
        $region30: #{tpu_custom_call.1} parent=27 // pred_check_branch
          %216 = sbr.rel (%p214) target = $region32
        $region31: #{tpu_custom_call.1} parent=27 // pred_region
          %p217 = scmp.lt.s32.totalorder %s22, 1
          %s218 = scalar_select %p217, %s22, 1
          %s219 = smul.addr %s218, 8
          %s220 = scalar_lea.vmem %s0, %s219
        $region32: #{tpu_custom_call.1} parent=27 // pred_fallthru
          _
        // Predicated region
        $region33: #{tpu_custom_call.1} parent=27 // pred_check
          %p221 = pneg %p73
        $region34: #{tpu_custom_call.1} parent=27 // pred_check_branch
          %223 = sbr.rel (%p221) target = $region36
        $region35: #{tpu_custom_call.1} parent=27 // pred_region
          %p224 = scmp.lt.s32.totalorder %s22, 1
          %s225 = scalar_select %p224, %s22, 1
          %s226 = smul.addr %s225, 8
          %s227 = scalar_lea.vmem %s1, %s226
        $region36: #{tpu_custom_call.1} parent=27 // pred_fallthru
          _
      $region28: #{tpu_custom_call.1} parent=5 // pred_fallthru
        _
      %p228 = scmp.le.s32.totalorder 1, %s15
      %p229 = scmp.lt.s32.totalorder %s15, 3
      %p230 = pnand %p228, %p229
      %p231 = pneg %p230
      // Predicated region
      $region37: #{tpu_custom_call.1} parent=5 // pred_check
        _
      $region38: #{tpu_custom_call.1} parent=5 // pred_check_branch
        %233 = sbr.rel (%p230) target = $region40
      $region39: #{tpu_custom_call.1} parent=5 // pred_region
        %s234 = ssub.s32 %s15, 1
        // Predicated region
        $region41: #{tpu_custom_call.1} parent=39 // pred_check
          %p235 = pneg %p105
        $region42: #{tpu_custom_call.1} parent=39 // pred_check_branch
          %237 = sbr.rel (%p235) target = $region44
        $region43: #{tpu_custom_call.1} parent=39 // pred_region
          %238 = dma.done [#allocation4], 768
        $region44: #{tpu_custom_call.1} parent=39 // pred_fallthru
          _
        %p239 = scmp.lt.s32.totalorder %s24, 1
        %s240 = scalar_select %p239, %s24, 1
        %s241 = smul.addr %s240, 8
        %s242 = scalar_lea.vmem %s0, %s241
        %p243 = pneg %p53
        %p244 = pneg %p50
        %p245 = scmp.lt.s32.totalorder %s24, 1
        %s246 = scalar_select %p245, %s24, 1
        %s247 = smul.addr %s246, 8
        %s248 = scalar_lea.vmem %s1, %s247
        %p249 = pneg %p79
        %p250 = pneg %p76
        %p251 = pneg %p105
        %p252 = pneg %p102
        %p253 = pneg %p126
        %p254 = pneg %p123
        %p255 = pneg %p147
        %p256 = pneg %p144
        %p257 = pneg %p173
        %p258 = pneg %p170
        %s259 = sand.u32 %s160, 1
        %s260 = scalar_lea.sflag [#allocation5], %s259
        %s261 = sand.u32 %s160, 1
        %s262 = smul.addr %s261, 16
        %s263 = scalar_lea.vmem [#allocation6], %s262
        %p264 = scmp.lt.s32.totalorder %s24, 1
        %s265 = scalar_select %p264, %s24, 1
        %s266 = smul.addr %s265, 8
        %s267 = scalar_lea.vmem %s0, %s266
        %p268 = scmp.lt.s32.totalorder %s24, 1
        %s269 = scalar_select %p268, %s24, 1
        %s270 = smul.addr %s269, 8
        %s271 = scalar_lea.vmem %s1, %s270
        %s272 = smul.u32 6, %s25
        %p273 = scmp.eq.s32.totalorder %s25, 0
        // Predicated region
        $region45: #{tpu_custom_call.1} parent=39 // pred_check
          %p274 = pneg %p273
        $region46: #{tpu_custom_call.1} parent=39 // pred_check_branch
          %276 = sbr.rel (%p274) target = $region48
        $region47: #{tpu_custom_call.1} parent=39 // pred_region
          %277 = vst [vmem:[#allocation2] sm:$0xff] 0.0
        $region48: #{tpu_custom_call.1} parent=39 // pred_fallthru
          _
        %s278 = smul.u32 %s25, 48
        %v279 = vlaneseq
        %v280 = vand.u32 %v279, 127
        %v281 = vstv %s278
        %v282 = vadd.s32 %v280, %v281
        %v283 = vld [vmem:[%s267] sm:$0xff]
        %284 = vset.pattern.permute.xlu0 0
        %285 = vperm.xlu0 %284, %v283
        %v286 = vpop.permute.xlu0 %285
        %vm287 = vcmp.eq.s32.totalorder %v286, %v282
        %288 = vset.pattern.permute.xlu0 1
        %289 = vperm.xlu0 %288, %v283
        %v290 = vpop.permute.xlu0 %289
        %vm291 = vcmp.eq.s32.totalorder %v290, %v282
        %vm292 = vmor %vm287, %vm291
        %v293 = vld [vmem:[#allocation2] sm:$0xff]
        %v294 = vsel %vm292, 1, 0
        %v295 = vcvt.s32.f32 %v294
        %v296 = vld [vmem:[#allocation3] sm:$0xff]
        %v297 = vld [vmem:[#allocation3 + $0x8] sm:$0xff]
        %v298 = vld [vmem:[#allocation3 + $0x10] sm:$0xff]
        %v299 = vld [vmem:[#allocation3 + $0x18] sm:$0xff]
        %v300 = vld [vmem:[#allocation3 + $0x20] sm:$0xff]
        %v301 = vld [vmem:[#allocation3 + $0x28] sm:$0xff]
        %vm302 = vcmask 392192
        %v304 = vsel %vm302, %v295, 0
        %306 = vmatprep.subr.mxu0 0.0
        %307 = vmatpush1.msra.mxu0 %v296
        %308 = vmatprep.subr.mxu0 0.0
        %309 = vmatpush1.msra.mxu0 %v297
        %310 = vmatprep.subr.mxu0 0.0
        %311 = vmatpush1.msra.mxu0 %v298
        %312 = vmatprep.subr.mxu0 0.0
        %313 = vmatpush1.msra.mxu0 %v299
        %314 = vmatprep.subr.mxu0 0.0
        %315 = vmatpush1.msra.mxu0 %v300
        %316 = vmatprep.subr.mxu0 0.0
        %317 = vmatpush1.msra.mxu0 %v301
        %318 = vmatprep.subr.mxu0 0.0
        %319 = vmatpush1.msra.mxu0 0.0
        %320 = vmatprep.subr.mxu0 0.0
        %321 = vmatpush1.msra.mxu0 0.0
        %322 = vmatprep.subr.mxu0 0.0
        %323 = vmatpush1.msra.mxu0 0.0
        %324 = vmatprep.subr.mxu0 0.0
        %325 = vmatpush1.msra.mxu0 0.0
        %326 = vmatprep.subr.mxu0 0.0
        %327 = vmatpush1.msra.mxu0 0.0
        %328 = vmatprep.subr.mxu0 0.0
        %329 = vmatpush1.msra.mxu0 0.0
        %330 = vmatprep.subr.mxu0 0.0
        %331 = vmatpush1.msra.mxu0 0.0
        %332 = vmatprep.subr.mxu0 0.0
        %333 = vmatpush1.msra.mxu0 0.0
        %334 = vmatprep.subr.mxu0 0.0
        %335 = vmatpush1.msra.mxu0 0.0
        %336 = vmatprep.subr.mxu0 0.0
        %337 = vmatpush1.msra.mxu0 0.0
        %338 = vmatprep.subr.mxu0 0.0
        %339 = vmatpush1.msra.mxu0 0.0
        %340 = vmatprep.subr.mxu0 0.0
        %341 = vmatpush1.msra.mxu0 0.0
        %342 = vmatprep.subr.mxu0 0.0
        %343 = vmatpush1.msra.mxu0 0.0
        %344 = vmatprep.subr.mxu0 0.0
        %345 = vmatpush1.msra.mxu0 0.0
        %346 = vmatprep.subr.mxu0 0.0
        %347 = vmatpush1.msra.mxu0 0.0
        %348 = vmatprep.subr.mxu0 0.0
        %349 = vmatpush1.msra.mxu0 0.0
        %350 = vmatprep.subr.mxu0 0.0
        %351 = vmatpush1.msra.mxu0 0.0
        %352 = vmatprep.subr.mxu0 0.0
        %353 = vmatpush1.msra.mxu0 0.0
        %354 = vmatprep.subr.mxu0 0.0
        %355 = vmatpush1.msra.mxu0 0.0
        %356 = vmatprep.subr.mxu0 0.0
        %357 = vmatpush1.msra.mxu0 0.0
        %358 = vmatprep.subr.mxu0 0.0
        %359 = vmatpush1.msra.mxu0 0.0
        %360 = vmatprep.subr.mxu0 0.0
        %361 = vmatpush1.msra.mxu0 0.0
        %362 = vmatprep.subr.mxu0 0.0
        %363 = vmatpush1.msra.mxu0 0.0
        %364 = vmatprep.subr.mxu0 0.0
        %365 = vmatpush1.msra.mxu0 0.0
        %366 = vmatprep.subr.mxu0 0.0
        %367 = vmatpush1.msra.mxu0 0.0
        %368 = vmatprep.subr.mxu0 0.0
        %369 = vmatpush1.msra.mxu0 0.0
        %370 = vmatprep.mubr.f32.mxu0 0.0
        %371 = vmatmul.mubr.f32.gmra.mrb[0].mxu0 %v304
        %v372 = vpop.f32.mrb[0].mxu0
        %v373 = vadd.f32 0.0, %v372
        %v374 = vpop.f32.mrb[0].mxu0
        %375 = vdwg.mxu0
        %v376 = vadd.f32 %v293, %v373
        %377 = vst [vmem:[#allocation2] sm:$0xff] %v376
        // Predicated region
        $region49: #{tpu_custom_call.1} parent=39 // pred_check
          %p378 = pneg %p273
        $region50: #{tpu_custom_call.1} parent=39 // pred_check_branch
          %380 = sbr.rel (%p378) target = $region52
        $region51: #{tpu_custom_call.1} parent=39 // pred_region
          %v381 = vld [vmem:[#allocation2] sm:$0xff]
          %v382 = vld [vmem:[%s271] sm:$0xff]
          %v383 = vadd.f32 %v381, %v382
          %384 = vadd.xlane.f32.xlu0 %v383
          %v385 = vpop.xlane.xlu0 %384
          %v386 = vmul.f32 %v385, 0.03125
          %v387 = vsub.f32 %v381, %v386
          %v388 = vsub.f32 %v382, %v386
          %v389 = vmul.f32 %v387, %v387
          %v390 = vmul.f32 %v388, %v388
          %v391 = vadd.f32 %v389, %v390
          %392 = vadd.xlane.f32.xlu0 %v391
          %v393 = vpop.xlane.xlu0 %392
          %v394 = vmul.f32 %v386, %v386
          %v395 = vmul.f32 %v394, 224.0
          %v396 = vsub.f32 %v393, %v395
          %v397 = vrcp.pop 31.0
          %v398 = vmul.f32 %v396, %v397
          %v399 = vrsqrt.pop %v398
          %v400 = vmul.f32 %v398, %v399
          %vm401 = vcmp.eq.f32.partialorder %v398, inf
          %v402 = vsel %vm401, %v398, %v400
          %vm403 = vcmp.eq.f32.partialorder %v398, 0.0
          %v404 = vand.u32 %v398, 2147483648
          %v405 = vsel %vm403, %v404, %v402
          %v406 = vadd.f32 %v405, 0.001
          %v407 = vrcp.pop %v406
          %v408 = vmul.f32 %v387, %v407
          %v409 = vmul.f32 %v388, %v407
          %v410 = vld [vmem:[%s3] sm:$0x3]
          %v412 = vlaneseq
          %v413 = vshrl.u32 %v412, 7
          %v414 = vsub.s32 0, %v413
          %v415 = vrot.slane %v410, %v414
          %v416 = vlaneseq
          %v417 = vshrl.u32 %v416, 7
          %v418 = vsub.s32 1, %v417
          %v419 = vrot.slane %v410, %v418
          %v422 = vmul.f32 %v408, %v415
          %v423 = vmul.f32 %v409, %v419
          %v424 = vld [vmem:[%s4] sm:$0x3]
          %v426 = vlaneseq
          %v427 = vshrl.u32 %v426, 7
          %v428 = vsub.s32 0, %v427
          %v429 = vrot.slane %v424, %v428
          %v430 = vlaneseq
          %v431 = vshrl.u32 %v430, 7
          %v432 = vsub.s32 1, %v431
          %v433 = vrot.slane %v424, %v432
          %v436 = vadd.f32 %v422, %v429
          %v437 = vadd.f32 %v423, %v433
          %438 = vst [vmem:[%s263] sm:$0xff] %v436
          %439 = vst [vmem:[%s263 + $0x8] sm:$0xff] %v437
        $region52: #{tpu_custom_call.1} parent=39 // pred_fallthru
          _
        %s440 = sand.u32 %s160, 1
        %s441 = scalar_lea.sflag [#allocation5], %s440
        %s442 = sand.u32 %s160, 1
        %s443 = smul.addr %s442, 16
        %s444 = scalar_lea.vmem [#allocation6], %s443
        // Predicated region
        $region53: #{tpu_custom_call.1} parent=39 // pred_check
          %p445 = pneg %p170
        $region54: #{tpu_custom_call.1} parent=39 // pred_check_branch
          %447 = sbr.rel (%p445) target = $region56
        $region55: #{tpu_custom_call.1} parent=39 // pred_region
          %s449 = ssub.s32 256, 256
          %450 = vsyncadd %s441, %s449
          %s451 = smul.addr %s24, 2
          %s452 = smul.addr %s451, 128
          %s453 = scalar_lea.hbm %s5, %s452
          %s455 = sshll.u32 %s444, 4
          %s456 = int_to_ptr.vmem [resolvable:$true] %s455
          %458 = dma.vmem_to_hbm [thread:$0]  %s456, 256, %s453, %s441
        $region56: #{tpu_custom_call.1} parent=39 // pred_fallthru
          _
      $region40: #{tpu_custom_call.1} parent=5 // pred_fallthru
        _
      %p459 = scmp.le.s32.totalorder 2, %s15
      // Predicated region
      $region57: #{tpu_custom_call.1} parent=5 // pred_check
        %p460 = pneg %p459
      $region58: #{tpu_custom_call.1} parent=5 // pred_check_branch
        %462 = sbr.rel (%p460) target = $region60
      $region59: #{tpu_custom_call.1} parent=5 // pred_region
        %s463 = ssub.s32 %s15, 2
        // Predicated region
        $region61: #{tpu_custom_call.1} parent=59 // pred_check
          %p464 = pneg %p176
        $region62: #{tpu_custom_call.1} parent=59 // pred_check_branch
          %466 = sbr.rel (%p464) target = $region64
        $region63: #{tpu_custom_call.1} parent=59 // pred_region
          %s467 = sand.u32 %s161, 1
          %s468 = scalar_lea.sflag [#allocation5], %s467
          %s469 = sand.u32 %s161, 1
          %s470 = smul.addr %s469, 16
          %s471 = scalar_lea.vmem [#allocation6], %s470
          %472 = dma.done %s468, 256
        $region64: #{tpu_custom_call.1} parent=59 // pred_fallthru
          _
      $region60: #{tpu_custom_call.1} parent=5 // pred_fallthru
        _
    $region6: #{tpu_custom_call.1} parent=1 // loop_footer
      %s19 = sadd.s32 1, %s15
    $region7: #{tpu_custom_call.1} parent=1 // loop_footer_branch
      %14 = sbr.rel target = $region3
    $region8: #{tpu_custom_call.1} parent=1 // loop_exit
      _
    %473 = vsyncpa [#allocation4], 1
    %s474 = scalar_lea.sflag [#allocation4], 1
    %475 = vsyncpa %s474, 1
    %476 = vsyncpa [#allocation5], 1
    %s477 = scalar_lea.sflag [#allocation5], 1
    %478 = vsyncpa %s477, 1

// kernel: tpu_custom_call.1
$region0: #{tpu_custom_call.1}
  #allocation0 [shape = 'u32[]', space=smem, size = 0x4, offset = 0x4, fixed_abs, tag = 'smem constant byte address 0x4 - core index']
  #allocation1 [shape = 'u32[144,128]{1,0:T(1,128)}', space=vmem, size = 0x12000, scoped, tag = 'internal scratch']
  #allocation2 [shape = 'f32[8,128]{1,0:T(8,128)}', space=vmem, size = 0x1000, scoped, tag = 'scratch operand']
  %s0 = inlined_call_operand.vmem [shape: s32[16,2], index: 0, kind: input, shape index: {}]
  %s1 = inlined_call_operand.vmem [shape: f32[16,128], index: 1, kind: input, shape index: {}]
  %s2 = inlined_call_operand.hbm [shape: f32[48,128], index: 2, kind: input, shape index: {}]
  %s3 = inlined_call_operand.vmem [shape: f32[1,256], index: 3, kind: input, shape index: {}]
  %s4 = inlined_call_operand.vmem [shape: f32[1,256], index: 4, kind: input, shape index: {}]
  %s5 = inlined_call_operand.hbm [shape: f32[16,256], index: 5, kind: output, shape index: {}]
  %s6 = sld [smem:[#allocation0]]
  $region65: #{tpu_custom_call.1} parent=0
    _
  %s8 = ssub.s32 1, %s6
  %s9 = scalar_select 0, %s8, %s6
  $region1: #{tpu_custom_call.1} parent=0
    #allocation3 [shape = 'u8[24576]{0}', space=vmem, size = 0x6000, scoped, tag = 'input window, operand 2, single buffered']
    #allocation4 [shape = 's32[2]{0}', space=sflag, size = 0x8, scoped, tag = 'scoped memory for tpu_custom_call.1']
    #allocation5 [shape = 's32[2]{0}', space=sflag, size = 0x8, scoped, tag = 'scoped memory for tpu_custom_call.1']
    #allocation6 [shape = 'u8[16384]{0}', space=vmem, size = 0x4000, scoped, tag = 'output window, operand 0']
    %10 = vsyncpa [#allocation4], 0
    %11 = vsyncpa [#allocation5], 0
    %s12 = scalar_lea.sflag [#allocation5], 1
    %13 = vsyncpa %s12, 0
    loop: start=0, step=1, limit=4
    $region2: #{tpu_custom_call.1} parent=1 // loop_pre_header
      _
    $region3: #{tpu_custom_call.1} parent=1 // loop_header
      %s15 = sphi 0, %s19
      %p16 = scmp.ge.s32.totalorder %s15, 4
      %s22 = sphi 0, %s34
      %s23 = sphi 0, %s30
      %s24 = sphi 0, %s22
      %s25 = sphi 0, %s23
      %s26 = sphi 0, %s24
      %s27 = sphi 0, %s25
      %s37 = sphi 0, %s39
      %s40 = sphi 0, %s37
      %s41 = sphi 0, %s40
      %s57 = sphi 0, %s41
      %s63 = sphi 0, %s65
      %s66 = sphi 0, %s63
      %s67 = sphi 0, %s66
      %s83 = sphi 0, %s67
      %s89 = sphi 0, %s91
      %s92 = sphi 0, %s89
      %s93 = sphi 0, %s92
      %s109 = sphi 0, %s93
      %s113 = sphi 0, %s113
      %s115 = sphi 0, %s113
      %s116 = sphi 0, %s115
      %s130 = sphi 0, %s116
      %s134 = sphi 0, %s134
      %s136 = sphi 0, %s134
      %s137 = sphi 0, %s136
      %s151 = sphi 0, %s137
      %s157 = sphi 0, %s159
      %s160 = sphi 0, %s157
      %s161 = sphi 0, %s160
      %s177 = sphi 0, %s161
    $region4: #{tpu_custom_call.1} parent=1 // loop_header_branch
      %18 = sbr.rel (%p16) target = $region8
    $region5: #{tpu_custom_call.1} parent=1 // loop_body
      %s20 = ssub.s32 %s15, 1
      %s21 = ssub.s32 %s15, 2
      %s28 = sadd.s32 1, %s23
      %p29 = scmp.ge.s32.totalorder %s28, 1
      %s30 = scalar_select %p29, 0, %s28
      %s31 = sadd.s32 1, %s22
      %s32 = scalar_select %p29, %s31, %s22
      %p33 = scmp.ge.s32.totalorder %s32, 2
      %s34 = scalar_select %p33, 0, %s32
      %s35 = ssub.s32 %s22, %s34
      %p36 = scmp.eq.s32.totalorder %s35, 0
      %s38 = sadd.s32 %s37, 1
      %s39 = scalar_select %p36, %s37, %s38
      %p42 = pneg %p36
      %p43 = scmp.eq.s32.totalorder %s15, 1
      %p44 = por %p42, %p43
      %p45 = scmp.ne.s32.totalorder %s37, %s40
      %p46 = scmp.eq.s32.totalorder %s15, 0
      %p47 = por %p45, %p46
      %p48 = scmp.ne.s32.totalorder %s37, %s40
      %p49 = scmp.eq.s32.totalorder %s20, 1
      %p50 = por %p48, %p49
      %p51 = scmp.ne.s32.totalorder %s40, %s41
      %p52 = scmp.eq.s32.totalorder %s20, 0
      %p53 = por %p51, %p52
      %p54 = scmp.ne.s32.totalorder %s40, %s41
      %p55 = scmp.eq.s32.totalorder %s21, 1
      %p56 = por %p54, %p55
      %p58 = scmp.ne.s32.totalorder %s41, %s57
      %p59 = scmp.eq.s32.totalorder %s21, 0
      %p60 = por %p58, %p59
      %s61 = ssub.s32 %s22, %s34
      %p62 = scmp.eq.s32.totalorder %s61, 0
      %s64 = sadd.s32 %s63, 1
      %s65 = scalar_select %p62, %s63, %s64
      %p68 = pneg %p62
      %p69 = scmp.eq.s32.totalorder %s15, 1
      %p70 = por %p68, %p69
      %p71 = scmp.ne.s32.totalorder %s63, %s66
      %p72 = scmp.eq.s32.totalorder %s15, 0
      %p73 = por %p71, %p72
      %p74 = scmp.ne.s32.totalorder %s63, %s66
      %p75 = scmp.eq.s32.totalorder %s20, 1
      %p76 = por %p74, %p75
      %p77 = scmp.ne.s32.totalorder %s66, %s67
      %p78 = scmp.eq.s32.totalorder %s20, 0
      %p79 = por %p77, %p78
      %p80 = scmp.ne.s32.totalorder %s66, %s67
      %p81 = scmp.eq.s32.totalorder %s21, 1
      %p82 = por %p80, %p81
      %p84 = scmp.ne.s32.totalorder %s67, %s83
      %p85 = scmp.eq.s32.totalorder %s21, 0
      %p86 = por %p84, %p85
      %s87 = ssub.s32 %s23, %s30
      %p88 = scmp.eq.s32.totalorder %s87, 0
      %s90 = sadd.s32 %s89, 1
      %s91 = scalar_select %p88, %s89, %s90
      %p94 = pneg %p88
      %p95 = scmp.eq.s32.totalorder %s15, 1
      %p96 = por %p94, %p95
      %p97 = scmp.ne.s32.totalorder %s89, %s92
      %p98 = scmp.eq.s32.totalorder %s15, 0
      %p99 = por %p97, %p98
      %p100 = scmp.ne.s32.totalorder %s89, %s92
      %p101 = scmp.eq.s32.totalorder %s20, 1
      %p102 = por %p100, %p101
      %p103 = scmp.ne.s32.totalorder %s92, %s93
      %p104 = scmp.eq.s32.totalorder %s20, 0
      %p105 = por %p103, %p104
      %p106 = scmp.ne.s32.totalorder %s92, %s93
      %p107 = scmp.eq.s32.totalorder %s21, 1
      %p108 = por %p106, %p107
      %p110 = scmp.ne.s32.totalorder %s93, %s109
      %p111 = scmp.eq.s32.totalorder %s21, 0
      %p112 = por %p110, %p111
      %s114 = sadd.s32 %s113, 1
      %p117 = scmp.eq.s32.totalorder %s15, 1
      %p118 = scmp.ne.s32.totalorder %s113, %s115
      %p119 = scmp.eq.s32.totalorder %s15, 0
      %p120 = por %p118, %p119
      %p121 = scmp.ne.s32.totalorder %s113, %s115
      %p122 = scmp.eq.s32.totalorder %s20, 1
      %p123 = por %p121, %p122
      %p124 = scmp.ne.s32.totalorder %s115, %s116
      %p125 = scmp.eq.s32.totalorder %s20, 0
      %p126 = por %p124, %p125
      %p127 = scmp.ne.s32.totalorder %s115, %s116
      %p128 = scmp.eq.s32.totalorder %s21, 1
      %p129 = por %p127, %p128
      %p131 = scmp.ne.s32.totalorder %s116, %s130
      %p132 = scmp.eq.s32.totalorder %s21, 0
      %p133 = por %p131, %p132
      %s135 = sadd.s32 %s134, 1
      %p138 = scmp.eq.s32.totalorder %s15, 1
      %p139 = scmp.ne.s32.totalorder %s134, %s136
      %p140 = scmp.eq.s32.totalorder %s15, 0
      %p141 = por %p139, %p140
      %p142 = scmp.ne.s32.totalorder %s134, %s136
      %p143 = scmp.eq.s32.totalorder %s20, 1
      %p144 = por %p142, %p143
      %p145 = scmp.ne.s32.totalorder %s136, %s137
      %p146 = scmp.eq.s32.totalorder %s20, 0
      %p147 = por %p145, %p146
      %p148 = scmp.ne.s32.totalorder %s136, %s137
      %p149 = scmp.eq.s32.totalorder %s21, 1
      %p150 = por %p148, %p149
      %p152 = scmp.ne.s32.totalorder %s137, %s151
      %p153 = scmp.eq.s32.totalorder %s21, 0
      %p154 = por %p152, %p153
      %s155 = ssub.s32 %s22, %s34
      %p156 = scmp.eq.s32.totalorder %s155, 0
      %s158 = sadd.s32 %s157, 1
      %s159 = scalar_select %p156, %s157, %s158
      %p162 = pneg %p156
      %p163 = scmp.eq.s32.totalorder %s15, 1
      %p164 = por %p162, %p163
      %p165 = scmp.ne.s32.totalorder %s157, %s160
      %p166 = scmp.eq.s32.totalorder %s15, 0
      %p167 = por %p165, %p166
      %p168 = scmp.ne.s32.totalorder %s157, %s160
      %p169 = scmp.eq.s32.totalorder %s20, 1
      %p170 = por %p168, %p169
      %p171 = scmp.ne.s32.totalorder %s160, %s161
      %p172 = scmp.eq.s32.totalorder %s20, 0
      %p173 = por %p171, %p172
      %p174 = scmp.ne.s32.totalorder %s160, %s161
      %p175 = scmp.eq.s32.totalorder %s21, 1
      %p176 = por %p174, %p175
      %p178 = scmp.ne.s32.totalorder %s161, %s177
      %p179 = scmp.eq.s32.totalorder %s21, 0
      %p180 = por %p178, %p179
      %p181 = scmp.le.s32.totalorder 1, %s15
      %p182 = scmp.lt.s32.totalorder %s15, 3
      %p183 = pnand %p181, %p182
      %p184 = pneg %p183
      // Predicated region
      $region9: #{tpu_custom_call.1} parent=5 // pred_check
        _
      $region10: #{tpu_custom_call.1} parent=5 // pred_check_branch
        %186 = sbr.rel (%p183) target = $region12
      $region11: #{tpu_custom_call.1} parent=5 // pred_region
        %s187 = ssub.s32 %s15, 1
        // Predicated region
        $region13: #{tpu_custom_call.1} parent=11 // pred_check
          %p188 = pneg %p105
        $region14: #{tpu_custom_call.1} parent=11 // pred_check_branch
          %190 = sbr.rel (%p188) target = $region16
        $region15: #{tpu_custom_call.1} parent=11 // pred_region
          %s191 = smul.u32 6, %s25
          %s193 = ssub.s32 768, 768
          %194 = vsyncadd [#allocation4], %s193
          %s195 = smul.addr %s191, 128
          %s196 = scalar_lea.hbm %s2, %s195
          %s197 = sshll.u32 [#allocation3], 4
          %s198 = int_to_ptr.vmem [resolvable:$true] %s197
          %203 = dma.hbm_to_vmem [thread:$0]  %s196, 768, %s198, [#allocation4], 128, 128, 8
        $region16: #{tpu_custom_call.1} parent=11 // pred_fallthru
          _
        // Predicated region
        $region17: #{tpu_custom_call.1} parent=11 // pred_check
          %p204 = pneg %p126
        $region18: #{tpu_custom_call.1} parent=11 // pred_check_branch
          %206 = sbr.rel (%p204) target = $region20
        $region19: #{tpu_custom_call.1} parent=11 // pred_region
          _
        $region20: #{tpu_custom_call.1} parent=11 // pred_fallthru
          _
        // Predicated region
        $region21: #{tpu_custom_call.1} parent=11 // pred_check
          %p207 = pneg %p147
        $region22: #{tpu_custom_call.1} parent=11 // pred_check_branch
          %209 = sbr.rel (%p207) target = $region24
        $region23: #{tpu_custom_call.1} parent=11 // pred_region
          _
        $region24: #{tpu_custom_call.1} parent=11 // pred_fallthru
          _
      $region12: #{tpu_custom_call.1} parent=5 // pred_fallthru
        _
      %p210 = scmp.lt.s32.totalorder %s15, 2
      // Predicated region
      $region25: #{tpu_custom_call.1} parent=5 // pred_check
        %p211 = pneg %p210
      $region26: #{tpu_custom_call.1} parent=5 // pred_check_branch
        %213 = sbr.rel (%p211) target = $region28
      $region27: #{tpu_custom_call.1} parent=5 // pred_region
        // Predicated region
        $region29: #{tpu_custom_call.1} parent=27 // pred_check
          %p214 = pneg %p47
        $region30: #{tpu_custom_call.1} parent=27 // pred_check_branch
          %216 = sbr.rel (%p214) target = $region32
        $region31: #{tpu_custom_call.1} parent=27 // pred_region
          %p217 = scmp.lt.s32.totalorder %s22, 1
          %s218 = scalar_select %p217, %s22, 1
          %s219 = smul.addr %s218, 8
          %s220 = scalar_lea.vmem %s0, %s219
        $region32: #{tpu_custom_call.1} parent=27 // pred_fallthru
          _
        // Predicated region
        $region33: #{tpu_custom_call.1} parent=27 // pred_check
          %p221 = pneg %p73
        $region34: #{tpu_custom_call.1} parent=27 // pred_check_branch
          %223 = sbr.rel (%p221) target = $region36
        $region35: #{tpu_custom_call.1} parent=27 // pred_region
          %p224 = scmp.lt.s32.totalorder %s22, 1
          %s225 = scalar_select %p224, %s22, 1
          %s226 = smul.addr %s225, 8
          %s227 = scalar_lea.vmem %s1, %s226
        $region36: #{tpu_custom_call.1} parent=27 // pred_fallthru
          _
      $region28: #{tpu_custom_call.1} parent=5 // pred_fallthru
        _
      %p228 = scmp.le.s32.totalorder 1, %s15
      %p229 = scmp.lt.s32.totalorder %s15, 3
      %p230 = pnand %p228, %p229
      %p231 = pneg %p230
      // Predicated region
      $region37: #{tpu_custom_call.1} parent=5 // pred_check
        _
      $region38: #{tpu_custom_call.1} parent=5 // pred_check_branch
        %233 = sbr.rel (%p230) target = $region40
      $region39: #{tpu_custom_call.1} parent=5 // pred_region
        %s234 = ssub.s32 %s15, 1
        // Predicated region
        $region41: #{tpu_custom_call.1} parent=39 // pred_check
          %p235 = pneg %p105
        $region42: #{tpu_custom_call.1} parent=39 // pred_check_branch
          %237 = sbr.rel (%p235) target = $region44
        $region43: #{tpu_custom_call.1} parent=39 // pred_region
          %238 = dma.done [#allocation4], 768
        $region44: #{tpu_custom_call.1} parent=39 // pred_fallthru
          _
        %p239 = scmp.lt.s32.totalorder %s24, 1
        %s240 = scalar_select %p239, %s24, 1
        %s241 = smul.addr %s240, 8
        %s242 = scalar_lea.vmem %s0, %s241
        %p243 = pneg %p53
        %p244 = pneg %p50
        %p245 = scmp.lt.s32.totalorder %s24, 1
        %s246 = scalar_select %p245, %s24, 1
        %s247 = smul.addr %s246, 8
        %s248 = scalar_lea.vmem %s1, %s247
        %p249 = pneg %p79
        %p250 = pneg %p76
        %p251 = pneg %p105
        %p252 = pneg %p102
        %p253 = pneg %p126
        %p254 = pneg %p123
        %p255 = pneg %p147
        %p256 = pneg %p144
        %p257 = pneg %p173
        %p258 = pneg %p170
        %s259 = sand.u32 %s160, 1
        %s260 = scalar_lea.sflag [#allocation5], %s259
        %s261 = sand.u32 %s160, 1
        %s262 = smul.addr %s261, 16
        %s263 = scalar_lea.vmem [#allocation6], %s262
        %p264 = scmp.lt.s32.totalorder %s24, 1
        %s265 = scalar_select %p264, %s24, 1
        %s266 = smul.addr %s265, 8
        %s267 = scalar_lea.vmem %s0, %s266
        %p268 = scmp.lt.s32.totalorder %s24, 1
        %s269 = scalar_select %p268, %s24, 1
        %s270 = smul.addr %s269, 8
        %s271 = scalar_lea.vmem %s1, %s270
        %s272 = smul.u32 6, %s25
        %p273 = scmp.eq.s32.totalorder %s25, 0
        // Predicated region
        $region45: #{tpu_custom_call.1} parent=39 // pred_check
          %p274 = pneg %p273
        $region46: #{tpu_custom_call.1} parent=39 // pred_check_branch
          %276 = sbr.rel (%p274) target = $region48
        $region47: #{tpu_custom_call.1} parent=39 // pred_region
          %277 = vst [vmem:[#allocation2] sm:$0xff] 0.0
        $region48: #{tpu_custom_call.1} parent=39 // pred_fallthru
          _
        %s278 = smul.u32 %s25, 48
        %v279 = vlaneseq
        %v280 = vand.u32 %v279, 127
        %v281 = vstv %s278
        %v282 = vadd.s32 %v280, %v281
        %v283 = vld [vmem:[%s267] sm:$0xff]
        %284 = vset.pattern.permute.xlu0 0
        %285 = vperm.xlu0 %284, %v283
        %v286 = vpop.permute.xlu0 %285
        %vm287 = vcmp.eq.s32.totalorder %v286, %v282
        %288 = vset.pattern.permute.xlu0 1
        %289 = vperm.xlu0 %288, %v283
        %v290 = vpop.permute.xlu0 %289
        %vm291 = vcmp.eq.s32.totalorder %v290, %v282
        %vm292 = vmor %vm287, %vm291
        %v293 = vld [vmem:[#allocation2] sm:$0xff]
        %v294 = vsel %vm292, 1, 0
        %v295 = vcvt.s32.f32 %v294
        %v296 = vld [vmem:[#allocation3] sm:$0xff]
        %v297 = vld [vmem:[#allocation3 + $0x8] sm:$0xff]
        %v298 = vld [vmem:[#allocation3 + $0x10] sm:$0xff]
        %v299 = vld [vmem:[#allocation3 + $0x18] sm:$0xff]
        %v300 = vld [vmem:[#allocation3 + $0x20] sm:$0xff]
        %v301 = vld [vmem:[#allocation3 + $0x28] sm:$0xff]
        %vm302 = vcmask 392192
        %v304 = vsel %vm302, %v295, 0
        %306 = vmatprep.subr.mxu0 0.0
        %307 = vmatpush1.msra.mxu0 %v296
        %308 = vmatprep.subr.mxu0 0.0
        %309 = vmatpush1.msra.mxu0 %v297
        %310 = vmatprep.subr.mxu0 0.0
        %311 = vmatpush1.msra.mxu0 %v298
        %312 = vmatprep.subr.mxu0 0.0
        %313 = vmatpush1.msra.mxu0 %v299
        %314 = vmatprep.subr.mxu0 0.0
        %315 = vmatpush1.msra.mxu0 %v300
        %316 = vmatprep.subr.mxu0 0.0
        %317 = vmatpush1.msra.mxu0 %v301
        %318 = vmatprep.subr.mxu0 0.0
        %319 = vmatpush1.msra.mxu0 0.0
        %320 = vmatprep.subr.mxu0 0.0
        %321 = vmatpush1.msra.mxu0 0.0
        %322 = vmatprep.subr.mxu0 0.0
        %323 = vmatpush1.msra.mxu0 0.0
        %324 = vmatprep.subr.mxu0 0.0
        %325 = vmatpush1.msra.mxu0 0.0
        %326 = vmatprep.subr.mxu0 0.0
        %327 = vmatpush1.msra.mxu0 0.0
        %328 = vmatprep.subr.mxu0 0.0
        %329 = vmatpush1.msra.mxu0 0.0
        %330 = vmatprep.subr.mxu0 0.0
        %331 = vmatpush1.msra.mxu0 0.0
        %332 = vmatprep.subr.mxu0 0.0
        %333 = vmatpush1.msra.mxu0 0.0
        %334 = vmatprep.subr.mxu0 0.0
        %335 = vmatpush1.msra.mxu0 0.0
        %336 = vmatprep.subr.mxu0 0.0
        %337 = vmatpush1.msra.mxu0 0.0
        %338 = vmatprep.subr.mxu0 0.0
        %339 = vmatpush1.msra.mxu0 0.0
        %340 = vmatprep.subr.mxu0 0.0
        %341 = vmatpush1.msra.mxu0 0.0
        %342 = vmatprep.subr.mxu0 0.0
        %343 = vmatpush1.msra.mxu0 0.0
        %344 = vmatprep.subr.mxu0 0.0
        %345 = vmatpush1.msra.mxu0 0.0
        %346 = vmatprep.subr.mxu0 0.0
        %347 = vmatpush1.msra.mxu0 0.0
        %348 = vmatprep.subr.mxu0 0.0
        %349 = vmatpush1.msra.mxu0 0.0
        %350 = vmatprep.subr.mxu0 0.0
        %351 = vmatpush1.msra.mxu0 0.0
        %352 = vmatprep.subr.mxu0 0.0
        %353 = vmatpush1.msra.mxu0 0.0
        %354 = vmatprep.subr.mxu0 0.0
        %355 = vmatpush1.msra.mxu0 0.0
        %356 = vmatprep.subr.mxu0 0.0
        %357 = vmatpush1.msra.mxu0 0.0
        %358 = vmatprep.subr.mxu0 0.0
        %359 = vmatpush1.msra.mxu0 0.0
        %360 = vmatprep.subr.mxu0 0.0
        %361 = vmatpush1.msra.mxu0 0.0
        %362 = vmatprep.subr.mxu0 0.0
        %363 = vmatpush1.msra.mxu0 0.0
        %364 = vmatprep.subr.mxu0 0.0
        %365 = vmatpush1.msra.mxu0 0.0
        %366 = vmatprep.subr.mxu0 0.0
        %367 = vmatpush1.msra.mxu0 0.0
        %368 = vmatprep.subr.mxu0 0.0
        %369 = vmatpush1.msra.mxu0 0.0
        %370 = vmatprep.mubr.f32.mxu0 0.0
        %371 = vmatmul.mubr.f32.gmra.mrb[0].mxu0 %v304
        %v372 = vpop.f32.mrb[0].mxu0
        %v373 = vadd.f32 0.0, %v372
        %v374 = vpop.f32.mrb[0].mxu0
        %375 = vdwg.mxu0
        %v376 = vadd.f32 %v293, %v373
        %377 = vst [vmem:[#allocation2] sm:$0xff] %v376
        // Predicated region
        $region49: #{tpu_custom_call.1} parent=39 // pred_check
          %p378 = pneg %p273
        $region50: #{tpu_custom_call.1} parent=39 // pred_check_branch
          %380 = sbr.rel (%p378) target = $region52
        $region51: #{tpu_custom_call.1} parent=39 // pred_region
          %v381 = vld [vmem:[#allocation2] sm:$0xff]
          %v382 = vld [vmem:[%s271] sm:$0xff]
          %v383 = vadd.f32 %v381, %v382
          %384 = vadd.xlane.f32.xlu0 %v383
          %v385 = vpop.xlane.xlu0 %384
          %v386 = vmul.f32 %v385, 0.03125
          %v387 = vsub.f32 %v381, %v386
          %v388 = vsub.f32 %v382, %v386
          %v389 = vmul.f32 %v387, %v387
          %v390 = vmul.f32 %v388, %v388
          %v391 = vadd.f32 %v389, %v390
          %392 = vadd.xlane.f32.xlu0 %v391
          %v393 = vpop.xlane.xlu0 %392
          %v394 = vmul.f32 %v386, %v386
          %v395 = vmul.f32 %v394, 224.0
          %v396 = vsub.f32 %v393, %v395
          %v397 = vrcp.pop 31.0
          %v398 = vmul.f32 %v396, %v397
          %v399 = vrsqrt.pop %v398
          %v400 = vmul.f32 %v398, %v399
          %vm401 = vcmp.eq.f32.partialorder %v398, inf
          %v402 = vsel %vm401, %v398, %v400
          %vm403 = vcmp.eq.f32.partialorder %v398, 0.0
          %v404 = vand.u32 %v398, 2147483648
          %v405 = vsel %vm403, %v404, %v402
          %v406 = vadd.f32 %v405, 0.001
          %v407 = vrcp.pop %v406
          %v408 = vmul.f32 %v387, %v407
          %v409 = vmul.f32 %v388, %v407
          %v410 = vld [vmem:[%s3] sm:$0x3]
          %v412 = vlaneseq
          %v413 = vshrl.u32 %v412, 7
          %v414 = vsub.s32 0, %v413
          %v415 = vrot.slane %v410, %v414
          %v416 = vlaneseq
          %v417 = vshrl.u32 %v416, 7
          %v418 = vsub.s32 1, %v417
          %v419 = vrot.slane %v410, %v418
          %v422 = vmul.f32 %v408, %v415
          %v423 = vmul.f32 %v409, %v419
          %v424 = vld [vmem:[%s4] sm:$0x3]
          %v426 = vlaneseq
          %v427 = vshrl.u32 %v426, 7
          %v428 = vsub.s32 0, %v427
          %v429 = vrot.slane %v424, %v428
          %v430 = vlaneseq
          %v431 = vshrl.u32 %v430, 7
          %v432 = vsub.s32 1, %v431
          %v433 = vrot.slane %v424, %v432
          %v436 = vadd.f32 %v422, %v429
          %v437 = vadd.f32 %v423, %v433
          %438 = vst [vmem:[%s263] sm:$0xff] %v436
          %439 = vst [vmem:[%s263 + $0x8] sm:$0xff] %v437
        $region52: #{tpu_custom_call.1} parent=39 // pred_fallthru
          _
        %s440 = sand.u32 %s160, 1
        %s441 = scalar_lea.sflag [#allocation5], %s440
        %s442 = sand.u32 %s160, 1
        %s443 = smul.addr %s442, 16
        %s444 = scalar_lea.vmem [#allocation6], %s443
        // Predicated region
        $region53: #{tpu_custom_call.1} parent=39 // pred_check
          %p445 = pneg %p170
        $region54: #{tpu_custom_call.1} parent=39 // pred_check_branch
          %447 = sbr.rel (%p445) target = $region56
        $region55: #{tpu_custom_call.1} parent=39 // pred_region
          %s449 = ssub.s32 256, 256
          %450 = vsyncadd %s441, %s449
          %s451 = smul.addr %s24, 2
          %s452 = smul.addr %s451, 128
          %s453 = scalar_lea.hbm %s5, %s452
          %s455 = sshll.u32 %s444, 4
          %s456 = int_to_ptr.vmem [resolvable:$true] %s455
          %458 = dma.vmem_to_hbm [thread:$0]  %s456, 256, %s453, %s441
        $region56: #{tpu_custom_call.1} parent=39 // pred_fallthru
          _
      $region40: #{tpu_custom_call.1} parent=5 // pred_fallthru
        _
      %p459 = scmp.le.s32.totalorder 2, %s15
      // Predicated region
      $region57: #{tpu_custom_call.1} parent=5 // pred_check
        %p460 = pneg %p459
      $region58: #{tpu_custom_call.1} parent=5 // pred_check_branch
        %462 = sbr.rel (%p460) target = $region60
      $region59: #{tpu_custom_call.1} parent=5 // pred_region
        %s463 = ssub.s32 %s15, 2
        // Predicated region
        $region61: #{tpu_custom_call.1} parent=59 // pred_check
          %p464 = pneg %p176
        $region62: #{tpu_custom_call.1} parent=59 // pred_check_branch
          %466 = sbr.rel (%p464) target = $region64
        $region63: #{tpu_custom_call.1} parent=59 // pred_region
          %s467 = sand.u32 %s161, 1
          %s468 = scalar_lea.sflag [#allocation5], %s467
          %s469 = sand.u32 %s161, 1
          %s470 = smul.addr %s469, 16
          %s471 = scalar_lea.vmem [#allocation6], %s470
          %472 = dma.done %s468, 256
        $region64: #{tpu_custom_call.1} parent=59 // pred_fallthru
          _
      $region60: #{tpu_custom_call.1} parent=5 // pred_fallthru
        _
    $region6: #{tpu_custom_call.1} parent=1 // loop_footer
      %s19 = sadd.s32 1, %s15
    $region7: #{tpu_custom_call.1} parent=1 // loop_footer_branch
      %14 = sbr.rel target = $region3
    $region8: #{tpu_custom_call.1} parent=1 // loop_exit
      _
    %473 = vsyncpa [#allocation4], 1
    %s474 = scalar_lea.sflag [#allocation4], 1
    %475 = vsyncpa %s474, 1
    %476 = vsyncpa [#allocation5], 1
    %s477 = scalar_lea.sflag [#allocation5], 1
    %478 = vsyncpa %s477, 1

</llo_original>
